<compile_context>
chip_gen: v6e
topology: v6e:2x2x1
jax: 0.10.0
libtpu: 0.0.40
codegen_flags: <defaults>
</compile_context>

<pallas_src>
import math

import jax
import jax.numpy as jnp
from jax.experimental import pallas as pl
from jax.experimental.pallas import tpu as pltpu

HL = 20          # hidden layer width (matches `hl = 20` in the torch script)
IN_FEATURES = 4  # bill_length, bill_depth, flipper_length, body_mass
OUT_CLASSES = 3  # Adelie / Chinstrap / Gentoo

_LANES = 128     # vreg lane width
_SUBLANES = 8    # vreg sublane count (f32)


def _mlp_kernel(xt_ref, w1t_ref, b1_ref, w2t_ref, b2_ref, ot_ref):
    # xt: [4, TB]  (batch lane-dense).  Weights/biases are VMEM-resident
    # (constant index_map), x/out tiles stream through double buffers.
    xt = xt_ref[...]
    h = jnp.dot(w1t_ref[...], xt,
                preferred_element_type=jnp.float32,
                precision=jax.lax.Precision.HIGHEST) + b1_ref[...]   # [20, TB]
    h = jnp.maximum(h, 0.0)                                          # F.relu
    o = jnp.dot(w2t_ref[...], h,
                preferred_element_type=jnp.float32,
                precision=jax.lax.Precision.HIGHEST) + b2_ref[...]   # [3, TB]
    ot_ref[...] = o.astype(ot_ref.dtype)


def _plan(batch, tb):
    """Static (tile, padded, grid, vmem_limit) for a given batch size.

    VMEM accounting (per the review): a (4, tile) f32 block pads sublanes
    4->8 and a (3, tile) block pads 3->8, so each buffer is 32*tile bytes;
    double-buffered input + output = 128*tile bytes, plus ~8 MiB headroom
    for the resident weights/biases and compiler scratch.  The default
    tile of 256K rows therefore needs ~40 MiB, which fits v7x's 64 MiB/TC
    and is well under v5e/v6e's 128 MiB physical VMEM.
    """
    tb = max(_LANES, (int(tb) // _LANES) * _LANES)
    padded128 = pl.cdiv(batch, _LANES) * _LANES
    # Prefer >= 2 grid steps so v7x's two TensorCores both get work.
    half = pl.cdiv(pl.cdiv(padded128, 2), _LANES) * _LANES
    tile = max(_LANES, min(tb, half))
    padded = pl.cdiv(padded128, tile) * tile
    grid = padded // tile
    buffers_bytes = 2 * 2 * (_SUBLANES * tile * 4)   # 128 * tile
    vmem_limit = buffers_bytes + (8 << 20)
    return tile, padded, grid, vmem_limit


def net_forward_fm(xt, w1, b1, w2, b2, *, tb=262144):
    """Hot path: feature-major forward pass with no wrapper layout copies.

    Args:
      xt: [4, batch]  float32  (feature-major input)
      w1: [4, 20]     float32  (torch fc1.weight.T)
      b1: [20]        float32
      w2: [20, 3]     float32  (torch fc2.weight.T)
      b2: [3]         float32
      tb: max batch-tile size (rounded to a multiple of 128 lanes).
    Returns:
      [3, batch] float32 logits (feature-major).
    """
    batch = xt.shape[1]
    tile, padded, grid, vmem_limit = _plan(batch, tb)

    if padded != batch:  # ragged tail only; aligned batches stream untouched
        xt = jnp.pad(xt, ((0, 0), (0, padded - batch)))

    w1t = w1.T                            # [20, 4]   VMEM-resident
    w2t = w2.T                            # [3, 20]   VMEM-resident
    b1c = b1.reshape(HL, 1)               # broadcast along lanes
    b2c = b2.reshape(OUT_CLASSES, 1)

    def resident(shape):
        # Full-array block, constant index_map -> stays in VMEM across steps.
        return pl.BlockSpec(shape, lambda i: (0, 0))

    weight_bytes = 4 * (IN_FEATURES * HL + HL + HL * OUT_CLASSES + OUT_CLASSES)
    cost = pl.CostEstimate(
        flops=2 * padded * (IN_FEATURES * HL + HL * OUT_CLASSES),
        transcendentals=0,
        bytes_accessed=4 * padded * (IN_FEATURES + OUT_CLASSES) + weight_bytes,
    )

    out_t = pl.pallas_call(
        _mlp_kernel,
        out_shape=jax.ShapeDtypeStruct((OUT_CLASSES, padded), jnp.float32),
        grid=(grid,),
        in_specs=[
            pl.BlockSpec((IN_FEATURES, tile), lambda i: (0, i)),  # x tile
            resident((HL, IN_FEATURES)),                          # W1^T
            resident((HL, 1)),                                    # b1
            resident((OUT_CLASSES, HL)),                          # W2^T
            resident((OUT_CLASSES, 1)),                           # b2
        ],
        out_specs=pl.BlockSpec((OUT_CLASSES, tile), lambda i: (0, i)),
        compiler_params=pltpu.CompilerParams(
            dimension_semantics=("parallel",),   # shard batch across TCs (v7x)
            vmem_limit_bytes=vmem_limit,
        ),
        cost_estimate=cost,
    )(xt, w1t, b1c, w2t, b2c)

    if padded != batch:
        out_t = out_t[:, :batch]
    return out_t


def net_forward(x, w1, b1, w2, b2, *, tb=262144):
    """Torch-layout compatibility wrapper: [batch, 4] -> [batch, 3].

    Note: the two transposes below are full-array XLA copies; for peak
    bandwidth on large batches feed feature-major data to `net_forward_fm`.
    """
    return net_forward_fm(x.T, w1, b1, w2, b2, tb=tb).T


def init_params(key):
    """Deterministic init mimicking torch.nn.Linear default U(-1/sqrt(fan_in), +)."""
    k1, k2, k3, k4 = jax.random.split(key, 4)
    bound1 = 1.0 / math.sqrt(IN_FEATURES)
    bound2 = 1.0 / math.sqrt(HL)
    w1 = jax.random.uniform(k1, (IN_FEATURES, HL), jnp.float32, -bound1, bound1)
    b1 = jax.random.uniform(k2, (HL,), jnp.float32, -bound1, bound1)
    w2 = jax.random.uniform(k3, (HL, OUT_CLASSES), jnp.float32, -bound2, bound2)
    b2 = jax.random.uniform(k4, (OUT_CLASSES,), jnp.float32, -bound2, bound2)
    return w1, b1, w2, b2


if __name__ == "__main__":
    key = jax.random.PRNGKey(0)
    kx, kp = jax.random.split(key)
    w1, b1, w2, b2 = init_params(kp)

    def ref_forward(xx):
        h = jnp.maximum(
            jnp.dot(xx, w1, precision=jax.lax.Precision.HIGHEST) + b1, 0.0)
        return jnp.dot(h, w2, precision=jax.lax.Precision.HIGHEST) + b2

    # 1) Small torch-layout batch (pads up to one 128-lane tile).
    batch = 8
    x = jax.random.normal(kx, (batch, IN_FEATURES), jnp.float32)
    out = jax.block_until_ready(net_forward(x, w1, b1, w2, b2))
    assert out.shape == (batch, OUT_CLASSES)
    assert jnp.allclose(out, ref_forward(x), atol=1e-5, rtol=1e-5)

    # 2) Ragged multi-tile batch: exercises grid > 1, VMEM-resident weights
    #    across steps, and the padded-tail path.
    batch2 = 300
    x2 = jax.random.normal(kx, (batch2, IN_FEATURES), jnp.float32)
    out2 = jax.block_until_ready(net_forward(x2, w1, b1, w2, b2, tb=128))
    assert out2.shape == (batch2, OUT_CLASSES)
    assert jnp.allclose(out2, ref_forward(x2), atol=1e-5, rtol=1e-5)

    # 3) Feature-major hot path (no wrapper layout copies), aligned batch,
    #    multi-step grid.
    batch3 = 512
    x3t = jax.random.normal(kx, (IN_FEATURES, batch3), jnp.float32)
    out3t = jax.block_until_ready(net_forward_fm(x3t, w1, b1, w2, b2, tb=128))
    assert out3t.shape == (OUT_CLASSES, batch3)
    assert jnp.allclose(out3t, ref_forward(x3t.T).T, atol=1e-5, rtol=1e-5)

    print("KERNEL_OK")
</pallas_src>

<mosaic_0001>
module attributes {stable_mosaic.version = 11 : i64} {
  func.func @_mlp_kernel(%arg0: i32, %arg1: memref<4x128xf32, #tpu.memory_space<vmem>>, %arg2: memref<20x4xf32, #tpu.memory_space<vmem>>, %arg3: memref<20x1xf32, #tpu.memory_space<vmem>>, %arg4: memref<3x20xf32, #tpu.memory_space<vmem>>, %arg5: memref<3x1xf32, #tpu.memory_space<vmem>>, %arg6: memref<3x128xf32, #tpu.memory_space<vmem>>) attributes {dimension_semantics = [#tpu.dimension_semantics<parallel>], iteration_bounds = array<i64: 1>, scalar_prefetch = 0 : i64, scratch_operands = 0 : i64, tpu.core_type = #tpu.core_type<tc>, window_params = [{transform_indices = @transform_0, window_bounds = array<i64: 4, 128>}, {pipeline_mode = #tpu.pipeline_mode<synchronous>, transform_indices = @transform_1, window_bounds = array<i64: 20, 4>}, {pipeline_mode = #tpu.pipeline_mode<synchronous>, transform_indices = @transform_2, window_bounds = array<i64: 20, 1>}, {pipeline_mode = #tpu.pipeline_mode<synchronous>, transform_indices = @transform_3, window_bounds = array<i64: 3, 20>}, {pipeline_mode = #tpu.pipeline_mode<synchronous>, transform_indices = @transform_4, window_bounds = array<i64: 3, 1>}, {transform_indices = @transform_5, window_bounds = array<i64: 3, 128>}]} {
    %c0 = arith.constant 0 : index
    %c0_0 = arith.constant 0 : index
    %0 = vector.load %arg1[%c0, %c0_0] : memref<4x128xf32, #tpu.memory_space<vmem>>, vector<4x128xf32>
    %c0_1 = arith.constant 0 : index
    %c0_2 = arith.constant 0 : index
    %1 = vector.load %arg2[%c0_1, %c0_2] : memref<20x4xf32, #tpu.memory_space<vmem>>, vector<20x4xf32>
    %cst = arith.constant dense<0.000000e+00> : vector<20x128xf32>
    %2 = tpu.matmul %1, %0, %cst {dimension_numbers = #tpu.dot_dimension_numbers<[1], [0], [0], [1], [0, 0, 1, 1], [], []>, precision = #tpu.contract_precision<fp32>} : vector<20x4xf32>, vector<4x128xf32>, vector<20x128xf32> -> vector<20x128xf32>
    %c0_3 = arith.constant 0 : index
    %c0_4 = arith.constant 0 : index
    %3 = vector.load %arg3[%c0_3, %c0_4] : memref<20x1xf32, #tpu.memory_space<vmem>>, vector<20x1xf32>
    %4 = vector.broadcast %3 : vector<20x1xf32> to vector<20x128xf32>
    %5 = arith.addf %2, %4 : vector<20x128xf32>
    %cst_5 = arith.constant 0.000000e+00 : f32
    %6 = vector.broadcast %cst_5 : f32 to vector<20x128xf32>
    %7 = arith.maximumf %5, %6 : vector<20x128xf32>
    %c0_6 = arith.constant 0 : index
    %c0_7 = arith.constant 0 : index
    %8 = vector.load %arg4[%c0_6, %c0_7] : memref<3x20xf32, #tpu.memory_space<vmem>>, vector<3x20xf32>
    %cst_8 = arith.constant dense<0.000000e+00> : vector<3x128xf32>
    %9 = tpu.matmul %8, %7, %cst_8 {dimension_numbers = #tpu.dot_dimension_numbers<[1], [0], [0], [1], [0, 0, 1, 1], [], []>, precision = #tpu.contract_precision<fp32>} : vector<3x20xf32>, vector<20x128xf32>, vector<3x128xf32> -> vector<3x128xf32>
    %c0_9 = arith.constant 0 : index
    %c0_10 = arith.constant 0 : index
    %10 = vector.load %arg5[%c0_9, %c0_10] : memref<3x1xf32, #tpu.memory_space<vmem>>, vector<3x1xf32>
    %11 = vector.broadcast %10 : vector<3x1xf32> to vector<3x128xf32>
    %12 = arith.addf %9, %11 : vector<3x128xf32>
    %c0_11 = arith.constant 0 : index
    %c0_12 = arith.constant 0 : index
    %13 = vector.load %arg6[%c0_11, %c0_12] : memref<3x128xf32, #tpu.memory_space<vmem>>, vector<3x128xf32>
    tpu.vector_store %arg6[%c0_11, %c0_12], %12 {strides = array<i32>} : memref<3x128xf32, #tpu.memory_space<vmem>>, vector<3x128xf32>,
    return
  }
  func.func @transform_0(%arg0: i32) -> (i32, i32) {
    %c0_i32 = arith.constant 0 : i32
    %c0_i32_0 = arith.constant 0 : i32
    return %c0_i32, %arg0 : i32, i32
  }
  func.func @transform_1(%arg0: i32) -> (i32, i32) {
    %c0_i32 = arith.constant 0 : i32
    %c0_i32_0 = arith.constant 0 : i32
    %c0_i32_1 = arith.constant 0 : i32
    return %c0_i32, %c0_i32_0 : i32, i32
  }
  func.func @transform_2(%arg0: i32) -> (i32, i32) {
    %c0_i32 = arith.constant 0 : i32
    %c0_i32_0 = arith.constant 0 : i32
    %c0_i32_1 = arith.constant 0 : i32
    return %c0_i32, %c0_i32_0 : i32, i32
  }
  func.func @transform_3(%arg0: i32) -> (i32, i32) {
    %c0_i32 = arith.constant 0 : i32
    %c0_i32_0 = arith.constant 0 : i32
    %c0_i32_1 = arith.constant 0 : i32
    return %c0_i32, %c0_i32_0 : i32, i32
  }
  func.func @transform_4(%arg0: i32) -> (i32, i32) {
    %c0_i32 = arith.constant 0 : i32
    %c0_i32_0 = arith.constant 0 : i32
    %c0_i32_1 = arith.constant 0 : i32
    return %c0_i32, %c0_i32_0 : i32, i32
  }
  func.func @transform_5(%arg0: i32) -> (i32, i32) {
    %c0_i32 = arith.constant 0 : i32
    %c0_i32_0 = arith.constant 0 : i32
    return %c0_i32, %arg0 : i32, i32
  }
}

</mosaic_0001>

<llo_original>
// kernel: tpu_custom_call.1
$region0: #{tpu_custom_call.1}
  #allocation0 [shape = 'u32[]', space=smem, size = 0x4, offset = 0x4, fixed_abs, tag = 'smem constant byte address 0x4 - core index']
  #allocation1 [shape = 'u32[144,128]{1,0:T(1,128)}', space=vmem, size = 0x12000, scoped, tag = 'internal scratch']
  %s0 = inlined_call_operand.vmem [shape: f32[4,128], index: 0, kind: input, shape index: {}]
  %s1 = inlined_call_operand.vmem [shape: f32[20,4], index: 1, kind: input, shape index: {}]
  %s2 = inlined_call_operand.vmem [shape: f32[20,1], index: 2, kind: input, shape index: {}]
  %s3 = inlined_call_operand.vmem [shape: f32[3,20], index: 3, kind: input, shape index: {}]
  %s4 = inlined_call_operand.vmem [shape: f32[3,1], index: 4, kind: input, shape index: {}]
  %s5 = inlined_call_operand.hbm [shape: f32[3,128], index: 5, kind: output, shape index: {}]
  %s6 = sld [smem:[#allocation0]]
  $region30: #{tpu_custom_call.1} parent=0
    _
  %s8 = ssub.s32 1, %s6
  %s9 = scalar_select 0, %s8, %s6
  $region1: #{tpu_custom_call.1} parent=0
    #allocation2 [shape = 'u8[2048]{0}', space=vmem, size = 0x800, scoped, tag = 'output window, operand 0, single buffered']
    #allocation3 [shape = 's32[1]{0}', space=sflag, size = 0x4, scoped, tag = 'scoped memory for tpu_custom_call.1']
    %10 = vsyncpa [#allocation3], 0
    // Predicated region
    $region2: #{tpu_custom_call.1} parent=1 // pred_check
      _
    $region3: #{tpu_custom_call.1} parent=1 // pred_check_branch
      %12 = sbr.rel (0) target = $region5
    $region4: #{tpu_custom_call.1} parent=1 // pred_region
      _
    $region5: #{tpu_custom_call.1} parent=1 // pred_fallthru
      _
    // Predicated region
    $region6: #{tpu_custom_call.1} parent=1 // pred_check
      _
    $region7: #{tpu_custom_call.1} parent=1 // pred_check_branch
      %14 = sbr.rel (0) target = $region9
    $region8: #{tpu_custom_call.1} parent=1 // pred_region
      _
    $region9: #{tpu_custom_call.1} parent=1 // pred_fallthru
      _
    // Predicated region
    $region10: #{tpu_custom_call.1} parent=1 // pred_check
      _
    $region11: #{tpu_custom_call.1} parent=1 // pred_check_branch
      %16 = sbr.rel (0) target = $region13
    $region12: #{tpu_custom_call.1} parent=1 // pred_region
      _
    $region13: #{tpu_custom_call.1} parent=1 // pred_fallthru
      _
    // Predicated region
    $region14: #{tpu_custom_call.1} parent=1 // pred_check
      _
    $region15: #{tpu_custom_call.1} parent=1 // pred_check_branch
      %18 = sbr.rel (0) target = $region17
    $region16: #{tpu_custom_call.1} parent=1 // pred_region
      _
    $region17: #{tpu_custom_call.1} parent=1 // pred_fallthru
      _
    // Predicated region
    $region18: #{tpu_custom_call.1} parent=1 // pred_check
      _
    $region19: #{tpu_custom_call.1} parent=1 // pred_check_branch
      %20 = sbr.rel (0) target = $region21
    $region20: #{tpu_custom_call.1} parent=1 // pred_region
      _
    $region21: #{tpu_custom_call.1} parent=1 // pred_fallthru
      _
    %v21 = vld [vmem:[%s0] sm:$0xf]
    %v22 = vld [vmem:[%s1] sm:$0xff]
    %v23 = vld [vmem:[%s1 + $0x8] sm:$0xff]
    %v24 = vld [vmem:[%s1 + $0x10] sm:$0xf]
    %v25 = vld [vmem:[%s2] sm:$0xff]
    %v26 = vld [vmem:[%s2 + $0x8] sm:$0xff]
    %v27 = vld [vmem:[%s2 + $0x10] sm:$0xf]
    %29 = vset.pattern.permute.xlu0 0
    %30 = vperm.xlu0 %29, %v25
    %v31 = vpop.permute.xlu0 %30
    %34 = vset.pattern.permute.xlu0 0
    %35 = vperm.xlu0 %34, %v26
    %v36 = vpop.permute.xlu0 %35
    %39 = vset.pattern.permute.xlu0 0
    %40 = vperm.xlu0 %39, %v27
    %v41 = vpop.permute.xlu0 %40
    %vm43 = vcmask 31744
    %v45 = vsel %vm43, %v22, 0
    %v48 = vsel %vm43, %v23, 0
    %v51 = vsel %vm43, %v24, 0
    %vm53 = vcmask 1043456
    %v55 = vsel %vm53, %v21, 0
    %57 = vmatprep.subr.mxu0 0.0
    %58 = vmatpush1.msra.mxu0 0.0
    %59 = vmatprep.subr.mxu0 0.0
    %60 = vmatpush1.msra.mxu0 0.0
    %61 = vmatprep.subr.mxu0 0.0
    %62 = vmatpush1.msra.mxu0 0.0
    %63 = vmatprep.subr.mxu0 0.0
    %64 = vmatpush1.msra.mxu0 0.0
    %65 = vmatprep.subr.mxu0 0.0
    %66 = vmatpush1.msra.mxu0 0.0
    %67 = vmatprep.subr.mxu0 0.0
    %68 = vmatpush1.msra.mxu0 0.0
    %69 = vmatprep.subr.mxu0 0.0
    %70 = vmatpush1.msra.mxu0 0.0
    %71 = vmatprep.subr.mxu0 0.0
    %72 = vmatpush1.msra.mxu0 0.0
    %73 = vmatprep.subr.mxu0 0.0
    %74 = vmatpush1.msra.mxu0 0.0
    %75 = vmatprep.subr.mxu0 0.0
    %76 = vmatpush1.msra.mxu0 0.0
    %77 = vmatprep.subr.mxu0 0.0
    %78 = vmatpush1.msra.mxu0 0.0
    %79 = vmatprep.subr.mxu0 0.0
    %80 = vmatpush1.msra.mxu0 0.0
    %81 = vmatprep.subr.mxu0 0.0
    %82 = vmatpush1.msra.mxu0 0.0
    %83 = vmatprep.subr.mxu0 0.0
    %84 = vmatpush1.msra.mxu0 0.0
    %85 = vmatprep.subr.mxu0 0.0
    %86 = vmatpush1.msra.mxu0 0.0
    %87 = vmatprep.subr.mxu0 0.0
    %v88 = vand.u32 %v55, 4294901760
    %89 = vmatpush1.msra.mxu0 %v88
    %90 = vmatprep.subr.mxu0 0.0
    %91 = vmatpush2.msra.mxu0 0.0
    %92 = vmatprep.subr.mxu0 0.0
    %93 = vmatpush2.msra.mxu0 0.0
    %94 = vmatprep.subr.mxu0 0.0
    %95 = vmatpush2.msra.mxu0 0.0
    %96 = vmatprep.subr.mxu0 0.0
    %97 = vmatpush2.msra.mxu0 0.0
    %98 = vmatprep.subr.mxu0 0.0
    %99 = vmatpush2.msra.mxu0 0.0
    %100 = vmatprep.subr.mxu0 0.0
    %101 = vmatpush2.msra.mxu0 0.0
    %102 = vmatprep.subr.mxu0 0.0
    %103 = vmatpush2.msra.mxu0 0.0
    %104 = vmatprep.subr.mxu0 0.0
    %105 = vmatpush2.msra.mxu0 0.0
    %106 = vmatprep.subr.mxu0 0.0
    %107 = vmatpush2.msra.mxu0 0.0
    %108 = vmatprep.subr.mxu0 0.0
    %109 = vmatpush2.msra.mxu0 0.0
    %110 = vmatprep.subr.mxu0 0.0
    %111 = vmatpush2.msra.mxu0 0.0
    %112 = vmatprep.subr.mxu0 0.0
    %113 = vmatpush2.msra.mxu0 0.0
    %114 = vmatprep.subr.mxu0 0.0
    %115 = vmatpush2.msra.mxu0 0.0
    %116 = vmatprep.subr.mxu0 0.0
    %117 = vmatpush2.msra.mxu0 0.0
    %118 = vmatprep.subr.mxu0 0.0
    %119 = vmatpush2.msra.mxu0 0.0
    %120 = vmatprep.subr.mxu0 0.0
    %121 = vmatpush2.msra.mxu0 0.0
    %122 = vmatprep.mubr.f32.mxu0 0.0
    %v123 = vand.u32 %v45, 4294901760
    %v124 = vsub.f32 %v45, %v123
    %v125 = vand.u32 %v124, 4294901760
    %v126 = vsub.f32 %v124, %v125
    %v127 = vand.u32 %v126, 4294901760
    %128 = vmatmul.mubr.f32.gmra.mxu0 %v127
    %v129 = vpop.f32.mrf.mxu0
    %v130 = vadd.f32 %v31, %v129
    %v131 = vpop.f32.mrf.mxu0
    %132 = vmatprep.mubr.f32.mxu0 0.0
    %v133 = vand.u32 %v48, 4294901760
    %v134 = vsub.f32 %v48, %v133
    %v135 = vand.u32 %v134, 4294901760
    %v136 = vsub.f32 %v134, %v135
    %v137 = vand.u32 %v136, 4294901760
    %138 = vmatmul.mubr.f32.gmra.mxu0 %v137
    %v139 = vpop.f32.mrf.mxu0
    %v140 = vadd.f32 %v36, %v139
    %v141 = vpop.f32.mrf.mxu0
    %142 = vmatprep.mubr.f32.mxu0 0.0
    %v143 = vand.u32 %v51, 4294901760
    %v144 = vsub.f32 %v51, %v143
    %v145 = vand.u32 %v144, 4294901760
    %v146 = vsub.f32 %v144, %v145
    %v147 = vand.u32 %v146, 4294901760
    %148 = vmatmul.mubr.f32.gmra.mxu0 %v147
    %v149 = vpop.f32.mrf.mxu0
    %v150 = vadd.f32 %v41, %v149
    %v151 = vpop.f32.mrf.mxu0
    %152 = vdwg.mxu0
    %153 = vmatprep.subr.mxu0 0.0
    %154 = vmatpush1.msra.mxu0 0.0
    %155 = vmatprep.subr.mxu0 0.0
    %156 = vmatpush1.msra.mxu0 0.0
    %157 = vmatprep.subr.mxu0 0.0
    %158 = vmatpush1.msra.mxu0 0.0
    %159 = vmatprep.subr.mxu0 0.0
    %160 = vmatpush1.msra.mxu0 0.0
    %161 = vmatprep.subr.mxu0 0.0
    %162 = vmatpush1.msra.mxu0 0.0
    %163 = vmatprep.subr.mxu0 0.0
    %164 = vmatpush1.msra.mxu0 0.0
    %165 = vmatprep.subr.mxu0 0.0
    %166 = vmatpush1.msra.mxu0 0.0
    %167 = vmatprep.subr.mxu0 0.0
    %168 = vmatpush1.msra.mxu0 0.0
    %169 = vmatprep.subr.mxu0 0.0
    %170 = vmatpush1.msra.mxu0 0.0
    %171 = vmatprep.subr.mxu0 0.0
    %172 = vmatpush1.msra.mxu0 0.0
    %173 = vmatprep.subr.mxu0 0.0
    %174 = vmatpush1.msra.mxu0 0.0
    %175 = vmatprep.subr.mxu0 0.0
    %176 = vmatpush1.msra.mxu0 0.0
    %177 = vmatprep.subr.mxu0 0.0
    %178 = vmatpush1.msra.mxu0 0.0
    %179 = vmatprep.subr.mxu0 0.0
    %180 = vmatpush1.msra.mxu0 0.0
    %181 = vmatprep.subr.mxu0 0.0
    %182 = vmatpush1.msra.mxu0 0.0
    %183 = vmatprep.subr.mxu0 0.0
    %v184 = vand.u32 %v55, 4294901760
    %v185 = vsub.f32 %v55, %v184
    %v186 = vand.u32 %v185, 4294901760
    %v187 = vsub.f32 %v185, %v186
    %v188 = vand.u32 %v187, 4294901760
    %189 = vmatpush1.msra.mxu0 %v188
    %190 = vmatprep.subr.mxu0 0.0
    %191 = vmatpush2.msra.mxu0 0.0
    %192 = vmatprep.subr.mxu0 0.0
    %193 = vmatpush2.msra.mxu0 0.0
    %194 = vmatprep.subr.mxu0 0.0
    %195 = vmatpush2.msra.mxu0 0.0
    %196 = vmatprep.subr.mxu0 0.0
    %197 = vmatpush2.msra.mxu0 0.0
    %198 = vmatprep.subr.mxu0 0.0
    %199 = vmatpush2.msra.mxu0 0.0
    %200 = vmatprep.subr.mxu0 0.0
    %201 = vmatpush2.msra.mxu0 0.0
    %202 = vmatprep.subr.mxu0 0.0
    %203 = vmatpush2.msra.mxu0 0.0
    %204 = vmatprep.subr.mxu0 0.0
    %205 = vmatpush2.msra.mxu0 0.0
    %206 = vmatprep.subr.mxu0 0.0
    %207 = vmatpush2.msra.mxu0 0.0
    %208 = vmatprep.subr.mxu0 0.0
    %209 = vmatpush2.msra.mxu0 0.0
    %210 = vmatprep.subr.mxu0 0.0
    %211 = vmatpush2.msra.mxu0 0.0
    %212 = vmatprep.subr.mxu0 0.0
    %213 = vmatpush2.msra.mxu0 0.0
    %214 = vmatprep.subr.mxu0 0.0
    %215 = vmatpush2.msra.mxu0 0.0
    %216 = vmatprep.subr.mxu0 0.0
    %217 = vmatpush2.msra.mxu0 0.0
    %218 = vmatprep.subr.mxu0 0.0
    %219 = vmatpush2.msra.mxu0 0.0
    %220 = vmatprep.subr.mxu0 0.0
    %221 = vmatpush2.msra.mxu0 0.0
    %222 = vmatprep.mubr.f32.mxu0 0.0
    %v223 = vand.u32 %v45, 4294901760
    %224 = vmatmul.mubr.f32.gmra.mxu0 %v223
    %v225 = vpop.f32.mrf.mxu0
    %v226 = vadd.f32 %v130, %v225
    %v227 = vpop.f32.mrf.mxu0
    %228 = vmatprep.mubr.f32.mxu0 0.0
    %v229 = vand.u32 %v48, 4294901760
    %230 = vmatmul.mubr.f32.gmra.mxu0 %v229
    %v231 = vpop.f32.mrf.mxu0
    %v232 = vadd.f32 %v140, %v231
    %v233 = vpop.f32.mrf.mxu0
    %234 = vmatprep.mubr.f32.mxu0 0.0
    %v235 = vand.u32 %v51, 4294901760
    %236 = vmatmul.mubr.f32.gmra.mxu0 %v235
    %v237 = vpop.f32.mrf.mxu0
    %v238 = vadd.f32 %v150, %v237
    %v239 = vpop.f32.mrf.mxu0
    %240 = vdwg.mxu0
    %241 = vmatprep.subr.mxu0 0.0
    %242 = vmatpush1.msra.mxu0 0.0
    %243 = vmatprep.subr.mxu0 0.0
    %244 = vmatpush1.msra.mxu0 0.0
    %245 = vmatprep.subr.mxu0 0.0
    %246 = vmatpush1.msra.mxu0 0.0
    %247 = vmatprep.subr.mxu0 0.0
    %248 = vmatpush1.msra.mxu0 0.0
    %249 = vmatprep.subr.mxu0 0.0
    %250 = vmatpush1.msra.mxu0 0.0
    %251 = vmatprep.subr.mxu0 0.0
    %252 = vmatpush1.msra.mxu0 0.0
    %253 = vmatprep.subr.mxu0 0.0
    %254 = vmatpush1.msra.mxu0 0.0
    %255 = vmatprep.subr.mxu0 0.0
    %256 = vmatpush1.msra.mxu0 0.0
    %257 = vmatprep.subr.mxu0 0.0
    %258 = vmatpush1.msra.mxu0 0.0
    %259 = vmatprep.subr.mxu0 0.0
    %260 = vmatpush1.msra.mxu0 0.0
    %261 = vmatprep.subr.mxu0 0.0
    %262 = vmatpush1.msra.mxu0 0.0
    %263 = vmatprep.subr.mxu0 0.0
    %264 = vmatpush1.msra.mxu0 0.0
    %265 = vmatprep.subr.mxu0 0.0
    %266 = vmatpush1.msra.mxu0 0.0
    %267 = vmatprep.subr.mxu0 0.0
    %268 = vmatpush1.msra.mxu0 0.0
    %269 = vmatprep.subr.mxu0 0.0
    %270 = vmatpush1.msra.mxu0 0.0
    %271 = vmatprep.subr.mxu0 0.0
    %v272 = vand.u32 %v55, 4294901760
    %v273 = vsub.f32 %v55, %v272
    %274 = vmatpush1.msra.mxu0 %v273
    %275 = vmatprep.subr.mxu0 0.0
    %276 = vmatpush2.msra.mxu0 0.0
    %277 = vmatprep.subr.mxu0 0.0
    %278 = vmatpush2.msra.mxu0 0.0
    %279 = vmatprep.subr.mxu0 0.0
    %280 = vmatpush2.msra.mxu0 0.0
    %281 = vmatprep.subr.mxu0 0.0
    %282 = vmatpush2.msra.mxu0 0.0
    %283 = vmatprep.subr.mxu0 0.0
    %284 = vmatpush2.msra.mxu0 0.0
    %285 = vmatprep.subr.mxu0 0.0
    %286 = vmatpush2.msra.mxu0 0.0
    %287 = vmatprep.subr.mxu0 0.0
    %288 = vmatpush2.msra.mxu0 0.0
    %289 = vmatprep.subr.mxu0 0.0
    %290 = vmatpush2.msra.mxu0 0.0
    %291 = vmatprep.subr.mxu0 0.0
    %292 = vmatpush2.msra.mxu0 0.0
    %293 = vmatprep.subr.mxu0 0.0
    %294 = vmatpush2.msra.mxu0 0.0
    %295 = vmatprep.subr.mxu0 0.0
    %296 = vmatpush2.msra.mxu0 0.0
    %297 = vmatprep.subr.mxu0 0.0
    %298 = vmatpush2.msra.mxu0 0.0
    %299 = vmatprep.subr.mxu0 0.0
    %300 = vmatpush2.msra.mxu0 0.0
    %301 = vmatprep.subr.mxu0 0.0
    %302 = vmatpush2.msra.mxu0 0.0
    %303 = vmatprep.subr.mxu0 0.0
    %304 = vmatpush2.msra.mxu0 0.0
    %305 = vmatprep.subr.mxu0 0.0
    %306 = vmatpush2.msra.mxu0 0.0
    %307 = vmatprep.mubr.f32.mxu0 0.0
    %v308 = vand.u32 %v45, 4294901760
    %v309 = vsub.f32 %v45, %v308
    %310 = vmatmul.mubr.f32.gmra.mxu0 %v309
    %v311 = vpop.f32.mrf.mxu0
    %v312 = vadd.f32 %v226, %v311
    %v313 = vpop.f32.mrf.mxu0
    %314 = vmatprep.mubr.f32.mxu0 0.0
    %v315 = vand.u32 %v48, 4294901760
    %v316 = vsub.f32 %v48, %v315
    %317 = vmatmul.mubr.f32.gmra.mxu0 %v316
    %v318 = vpop.f32.mrf.mxu0
    %v319 = vadd.f32 %v232, %v318
    %v320 = vpop.f32.mrf.mxu0
    %321 = vmatprep.mubr.f32.mxu0 0.0
    %v322 = vand.u32 %v51, 4294901760
    %v323 = vsub.f32 %v51, %v322
    %324 = vmatmul.mubr.f32.gmra.mxu0 %v323
    %v325 = vpop.f32.mrf.mxu0
    %v326 = vadd.f32 %v238, %v325
    %v327 = vpop.f32.mrf.mxu0
    %328 = vdwg.mxu0
    %329 = vmatprep.subr.mxu0 0.0
    %330 = vmatpush1.msra.mxu0 0.0
    %331 = vmatprep.subr.mxu0 0.0
    %332 = vmatpush1.msra.mxu0 0.0
    %333 = vmatprep.subr.mxu0 0.0
    %334 = vmatpush1.msra.mxu0 0.0
    %335 = vmatprep.subr.mxu0 0.0
    %336 = vmatpush1.msra.mxu0 0.0
    %337 = vmatprep.subr.mxu0 0.0
    %338 = vmatpush1.msra.mxu0 0.0
    %339 = vmatprep.subr.mxu0 0.0
    %340 = vmatpush1.msra.mxu0 0.0
    %341 = vmatprep.subr.mxu0 0.0
    %342 = vmatpush1.msra.mxu0 0.0
    %343 = vmatprep.subr.mxu0 0.0
    %344 = vmatpush1.msra.mxu0 0.0
    %345 = vmatprep.subr.mxu0 0.0
    %346 = vmatpush1.msra.mxu0 0.0
    %347 = vmatprep.subr.mxu0 0.0
    %348 = vmatpush1.msra.mxu0 0.0
    %349 = vmatprep.subr.mxu0 0.0
    %350 = vmatpush1.msra.mxu0 0.0
    %351 = vmatprep.subr.mxu0 0.0
    %352 = vmatpush1.msra.mxu0 0.0
    %353 = vmatprep.subr.mxu0 0.0
    %354 = vmatpush1.msra.mxu0 0.0
    %355 = vmatprep.subr.mxu0 0.0
    %356 = vmatpush1.msra.mxu0 0.0
    %357 = vmatprep.subr.mxu0 0.0
    %358 = vmatpush1.msra.mxu0 0.0
    %359 = vmatprep.subr.mxu0 0.0
    %v360 = vand.u32 %v55, 4294901760
    %361 = vmatpush1.msra.mxu0 %v360
    %362 = vmatprep.subr.mxu0 0.0
    %363 = vmatpush2.msra.mxu0 0.0
    %364 = vmatprep.subr.mxu0 0.0
    %365 = vmatpush2.msra.mxu0 0.0
    %366 = vmatprep.subr.mxu0 0.0
    %367 = vmatpush2.msra.mxu0 0.0
    %368 = vmatprep.subr.mxu0 0.0
    %369 = vmatpush2.msra.mxu0 0.0
    %370 = vmatprep.subr.mxu0 0.0
    %371 = vmatpush2.msra.mxu0 0.0
    %372 = vmatprep.subr.mxu0 0.0
    %373 = vmatpush2.msra.mxu0 0.0
    %374 = vmatprep.subr.mxu0 0.0
    %375 = vmatpush2.msra.mxu0 0.0
    %376 = vmatprep.subr.mxu0 0.0
    %377 = vmatpush2.msra.mxu0 0.0
    %378 = vmatprep.subr.mxu0 0.0
    %379 = vmatpush2.msra.mxu0 0.0
    %380 = vmatprep.subr.mxu0 0.0
    %381 = vmatpush2.msra.mxu0 0.0
    %382 = vmatprep.subr.mxu0 0.0
    %383 = vmatpush2.msra.mxu0 0.0
    %384 = vmatprep.subr.mxu0 0.0
    %385 = vmatpush2.msra.mxu0 0.0
    %386 = vmatprep.subr.mxu0 0.0
    %387 = vmatpush2.msra.mxu0 0.0
    %388 = vmatprep.subr.mxu0 0.0
    %389 = vmatpush2.msra.mxu0 0.0
    %390 = vmatprep.subr.mxu0 0.0
    %391 = vmatpush2.msra.mxu0 0.0
    %392 = vmatprep.subr.mxu0 0.0
    %393 = vmatpush2.msra.mxu0 0.0
    %394 = vmatprep.mubr.f32.mxu0 0.0
    %v395 = vand.u32 %v45, 4294901760
    %v396 = vsub.f32 %v45, %v395
    %v397 = vand.u32 %v396, 4294901760
    %398 = vmatmul.mubr.f32.gmra.mxu0 %v397
    %v399 = vpop.f32.mrf.mxu0
    %v400 = vadd.f32 %v312, %v399
    %v401 = vpop.f32.mrf.mxu0
    %402 = vmatprep.mubr.f32.mxu0 0.0
    %v403 = vand.u32 %v48, 4294901760
    %v404 = vsub.f32 %v48, %v403
    %v405 = vand.u32 %v404, 4294901760
    %406 = vmatmul.mubr.f32.gmra.mxu0 %v405
    %v407 = vpop.f32.mrf.mxu0
    %v408 = vadd.f32 %v319, %v407
    %v409 = vpop.f32.mrf.mxu0
    %410 = vmatprep.mubr.f32.mxu0 0.0
    %v411 = vand.u32 %v51, 4294901760
    %v412 = vsub.f32 %v51, %v411
    %v413 = vand.u32 %v412, 4294901760
    %414 = vmatmul.mubr.f32.gmra.mxu0 %v413
    %v415 = vpop.f32.mrf.mxu0
    %v416 = vadd.f32 %v326, %v415
    %v417 = vpop.f32.mrf.mxu0
    %418 = vdwg.mxu0
    %419 = vmatprep.subr.mxu0 0.0
    %420 = vmatpush1.msra.mxu0 0.0
    %421 = vmatprep.subr.mxu0 0.0
    %422 = vmatpush1.msra.mxu0 0.0
    %423 = vmatprep.subr.mxu0 0.0
    %424 = vmatpush1.msra.mxu0 0.0
    %425 = vmatprep.subr.mxu0 0.0
    %426 = vmatpush1.msra.mxu0 0.0
    %427 = vmatprep.subr.mxu0 0.0
    %428 = vmatpush1.msra.mxu0 0.0
    %429 = vmatprep.subr.mxu0 0.0
    %430 = vmatpush1.msra.mxu0 0.0
    %431 = vmatprep.subr.mxu0 0.0
    %432 = vmatpush1.msra.mxu0 0.0
    %433 = vmatprep.subr.mxu0 0.0
    %434 = vmatpush1.msra.mxu0 0.0
    %435 = vmatprep.subr.mxu0 0.0
    %436 = vmatpush1.msra.mxu0 0.0
    %437 = vmatprep.subr.mxu0 0.0
    %438 = vmatpush1.msra.mxu0 0.0
    %439 = vmatprep.subr.mxu0 0.0
    %440 = vmatpush1.msra.mxu0 0.0
    %441 = vmatprep.subr.mxu0 0.0
    %442 = vmatpush1.msra.mxu0 0.0
    %443 = vmatprep.subr.mxu0 0.0
    %444 = vmatpush1.msra.mxu0 0.0
    %445 = vmatprep.subr.mxu0 0.0
    %446 = vmatpush1.msra.mxu0 0.0
    %447 = vmatprep.subr.mxu0 0.0
    %448 = vmatpush1.msra.mxu0 0.0
    %449 = vmatprep.subr.mxu0 0.0
    %v450 = vand.u32 %v55, 4294901760
    %v451 = vsub.f32 %v55, %v450
    %v452 = vand.u32 %v451, 4294901760
    %453 = vmatpush1.msra.mxu0 %v452
    %454 = vmatprep.subr.mxu0 0.0
    %455 = vmatpush2.msra.mxu0 0.0
    %456 = vmatprep.subr.mxu0 0.0
    %457 = vmatpush2.msra.mxu0 0.0
    %458 = vmatprep.subr.mxu0 0.0
    %459 = vmatpush2.msra.mxu0 0.0
    %460 = vmatprep.subr.mxu0 0.0
    %461 = vmatpush2.msra.mxu0 0.0
    %462 = vmatprep.subr.mxu0 0.0
    %463 = vmatpush2.msra.mxu0 0.0
    %464 = vmatprep.subr.mxu0 0.0
    %465 = vmatpush2.msra.mxu0 0.0
    %466 = vmatprep.subr.mxu0 0.0
    %467 = vmatpush2.msra.mxu0 0.0
    %468 = vmatprep.subr.mxu0 0.0
    %469 = vmatpush2.msra.mxu0 0.0
    %470 = vmatprep.subr.mxu0 0.0
    %471 = vmatpush2.msra.mxu0 0.0
    %472 = vmatprep.subr.mxu0 0.0
    %473 = vmatpush2.msra.mxu0 0.0
    %474 = vmatprep.subr.mxu0 0.0
    %475 = vmatpush2.msra.mxu0 0.0
    %476 = vmatprep.subr.mxu0 0.0
    %477 = vmatpush2.msra.mxu0 0.0
    %478 = vmatprep.subr.mxu0 0.0
    %479 = vmatpush2.msra.mxu0 0.0
    %480 = vmatprep.subr.mxu0 0.0
    %481 = vmatpush2.msra.mxu0 0.0
    %482 = vmatprep.subr.mxu0 0.0
    %483 = vmatpush2.msra.mxu0 0.0
    %484 = vmatprep.subr.mxu0 0.0
    %485 = vmatpush2.msra.mxu0 0.0
    %486 = vmatprep.mubr.f32.mxu0 0.0
    %v487 = vand.u32 %v45, 4294901760
    %488 = vmatmul.mubr.f32.gmra.mxu0 %v487
    %v489 = vpop.f32.mrf.mxu0
    %v490 = vadd.f32 %v400, %v489
    %v491 = vpop.f32.mrf.mxu0
    %492 = vmatprep.mubr.f32.mxu0 0.0
    %v493 = vand.u32 %v48, 4294901760
    %494 = vmatmul.mubr.f32.gmra.mxu0 %v493
    %v495 = vpop.f32.mrf.mxu0
    %v496 = vadd.f32 %v408, %v495
    %v497 = vpop.f32.mrf.mxu0
    %498 = vmatprep.mubr.f32.mxu0 0.0
    %v499 = vand.u32 %v51, 4294901760
    %500 = vmatmul.mubr.f32.gmra.mxu0 %v499
    %v501 = vpop.f32.mrf.mxu0
    %v502 = vadd.f32 %v416, %v501
    %v503 = vpop.f32.mrf.mxu0
    %504 = vdwg.mxu0
    %505 = vmatprep.subr.mxu0 0.0
    %506 = vmatpush1.msra.mxu0 0.0
    %507 = vmatprep.subr.mxu0 0.0
    %508 = vmatpush1.msra.mxu0 0.0
    %509 = vmatprep.subr.mxu0 0.0
    %510 = vmatpush1.msra.mxu0 0.0
    %511 = vmatprep.subr.mxu0 0.0
    %512 = vmatpush1.msra.mxu0 0.0
    %513 = vmatprep.subr.mxu0 0.0
    %514 = vmatpush1.msra.mxu0 0.0
    %515 = vmatprep.subr.mxu0 0.0
    %516 = vmatpush1.msra.mxu0 0.0
    %517 = vmatprep.subr.mxu0 0.0
    %518 = vmatpush1.msra.mxu0 0.0
    %519 = vmatprep.subr.mxu0 0.0
    %520 = vmatpush1.msra.mxu0 0.0
    %521 = vmatprep.subr.mxu0 0.0
    %522 = vmatpush1.msra.mxu0 0.0
    %523 = vmatprep.subr.mxu0 0.0
    %524 = vmatpush1.msra.mxu0 0.0
    %525 = vmatprep.subr.mxu0 0.0
    %526 = vmatpush1.msra.mxu0 0.0
    %527 = vmatprep.subr.mxu0 0.0
    %528 = vmatpush1.msra.mxu0 0.0
    %529 = vmatprep.subr.mxu0 0.0
    %530 = vmatpush1.msra.mxu0 0.0
    %531 = vmatprep.subr.mxu0 0.0
    %532 = vmatpush1.msra.mxu0 0.0
    %533 = vmatprep.subr.mxu0 0.0
    %534 = vmatpush1.msra.mxu0 0.0
    %535 = vmatprep.subr.mxu0 0.0
    %v536 = vand.u32 %v55, 4294901760
    %537 = vmatpush1.msra.mxu0 %v536
    %538 = vmatprep.subr.mxu0 0.0
    %539 = vmatpush2.msra.mxu0 0.0
    %540 = vmatprep.subr.mxu0 0.0
    %541 = vmatpush2.msra.mxu0 0.0
    %542 = vmatprep.subr.mxu0 0.0
    %543 = vmatpush2.msra.mxu0 0.0
    %544 = vmatprep.subr.mxu0 0.0
    %545 = vmatpush2.msra.mxu0 0.0
    %546 = vmatprep.subr.mxu0 0.0
    %547 = vmatpush2.msra.mxu0 0.0
    %548 = vmatprep.subr.mxu0 0.0
    %549 = vmatpush2.msra.mxu0 0.0
    %550 = vmatprep.subr.mxu0 0.0
    %551 = vmatpush2.msra.mxu0 0.0
    %552 = vmatprep.subr.mxu0 0.0
    %553 = vmatpush2.msra.mxu0 0.0
    %554 = vmatprep.subr.mxu0 0.0
    %555 = vmatpush2.msra.mxu0 0.0
    %556 = vmatprep.subr.mxu0 0.0
    %557 = vmatpush2.msra.mxu0 0.0
    %558 = vmatprep.subr.mxu0 0.0
    %559 = vmatpush2.msra.mxu0 0.0
    %560 = vmatprep.subr.mxu0 0.0
    %561 = vmatpush2.msra.mxu0 0.0
    %562 = vmatprep.subr.mxu0 0.0
    %563 = vmatpush2.msra.mxu0 0.0
    %564 = vmatprep.subr.mxu0 0.0
    %565 = vmatpush2.msra.mxu0 0.0
    %566 = vmatprep.subr.mxu0 0.0
    %567 = vmatpush2.msra.mxu0 0.0
    %568 = vmatprep.subr.mxu0 0.0
    %569 = vmatpush2.msra.mxu0 0.0
    %570 = vmatprep.mubr.f32.mxu0 0.0
    %v571 = vand.u32 %v45, 4294901760
    %572 = vmatmul.mubr.f32.gmra.mxu0 %v571
    %v573 = vpop.f32.mrf.mxu0
    %v574 = vadd.f32 %v490, %v573
    %v575 = vpop.f32.mrf.mxu0
    %576 = vmatprep.mubr.f32.mxu0 0.0
    %v577 = vand.u32 %v48, 4294901760
    %578 = vmatmul.mubr.f32.gmra.mxu0 %v577
    %v579 = vpop.f32.mrf.mxu0
    %v580 = vadd.f32 %v496, %v579
    %v581 = vpop.f32.mrf.mxu0
    %582 = vmatprep.mubr.f32.mxu0 0.0
    %v583 = vand.u32 %v51, 4294901760
    %584 = vmatmul.mubr.f32.gmra.mxu0 %v583
    %v585 = vpop.f32.mrf.mxu0
    %v586 = vadd.f32 %v502, %v585
    %v587 = vpop.f32.mrf.mxu0
    %588 = vdwg.mxu0
    %v589 = vmax.f32 %v574, 0.0
    %v590 = vmax.f32 %v580, 0.0
    %v591 = vmax.f32 %v586, 0.0
    %v592 = vld [vmem:[%s3] sm:$0x7]
    %v593 = vld [vmem:[%s4] sm:$0x7]
    %595 = vset.pattern.permute.xlu0 0
    %596 = vperm.xlu0 %595, %v593
    %v597 = vpop.permute.xlu0 %596
    %vm599 = vcmask 162816
    %v601 = vsel %vm599, %v592, 0
    %v604 = vsel %vm53, %v591, 0
    %606 = vmatprep.subr.mxu0 0.0
    %607 = vmatpush1.msra.mxu0 0.0
    %608 = vmatprep.subr.mxu0 0.0
    %609 = vmatpush1.msra.mxu0 0.0
    %610 = vmatprep.subr.mxu0 0.0
    %611 = vmatpush1.msra.mxu0 0.0
    %612 = vmatprep.subr.mxu0 0.0
    %613 = vmatpush1.msra.mxu0 0.0
    %614 = vmatprep.subr.mxu0 0.0
    %615 = vmatpush1.msra.mxu0 0.0
    %616 = vmatprep.subr.mxu0 0.0
    %617 = vmatpush1.msra.mxu0 0.0
    %618 = vmatprep.subr.mxu0 0.0
    %619 = vmatpush1.msra.mxu0 0.0
    %620 = vmatprep.subr.mxu0 0.0
    %621 = vmatpush1.msra.mxu0 0.0
    %622 = vmatprep.subr.mxu0 0.0
    %623 = vmatpush1.msra.mxu0 0.0
    %624 = vmatprep.subr.mxu0 0.0
    %625 = vmatpush1.msra.mxu0 0.0
    %626 = vmatprep.subr.mxu0 0.0
    %627 = vmatpush1.msra.mxu0 0.0
    %628 = vmatprep.subr.mxu0 0.0
    %629 = vmatpush1.msra.mxu0 0.0
    %630 = vmatprep.subr.mxu0 0.0
    %631 = vmatpush1.msra.mxu0 0.0
    %632 = vmatprep.subr.mxu0 0.0
    %v633 = vand.u32 %v604, 4294901760
    %634 = vmatpush1.msra.mxu0 %v633
    %635 = vmatprep.subr.mxu0 0.0
    %v636 = vand.u32 %v590, 4294901760
    %637 = vmatpush1.msra.mxu0 %v636
    %638 = vmatprep.subr.mxu0 0.0
    %v639 = vand.u32 %v589, 4294901760
    %640 = vmatpush1.msra.mxu0 %v639
    %641 = vmatprep.subr.mxu0 0.0
    %642 = vmatpush2.msra.mxu0 0.0
    %643 = vmatprep.subr.mxu0 0.0
    %644 = vmatpush2.msra.mxu0 0.0
    %645 = vmatprep.subr.mxu0 0.0
    %646 = vmatpush2.msra.mxu0 0.0
    %647 = vmatprep.subr.mxu0 0.0
    %648 = vmatpush2.msra.mxu0 0.0
    %649 = vmatprep.subr.mxu0 0.0
    %650 = vmatpush2.msra.mxu0 0.0
    %651 = vmatprep.subr.mxu0 0.0
    %652 = vmatpush2.msra.mxu0 0.0
    %653 = vmatprep.subr.mxu0 0.0
    %654 = vmatpush2.msra.mxu0 0.0
    %655 = vmatprep.subr.mxu0 0.0
    %656 = vmatpush2.msra.mxu0 0.0
    %657 = vmatprep.subr.mxu0 0.0
    %658 = vmatpush2.msra.mxu0 0.0
    %659 = vmatprep.subr.mxu0 0.0
    %660 = vmatpush2.msra.mxu0 0.0
    %661 = vmatprep.subr.mxu0 0.0
    %662 = vmatpush2.msra.mxu0 0.0
    %663 = vmatprep.subr.mxu0 0.0
    %664 = vmatpush2.msra.mxu0 0.0
    %665 = vmatprep.subr.mxu0 0.0
    %666 = vmatpush2.msra.mxu0 0.0
    %667 = vmatprep.subr.mxu0 0.0
    %668 = vmatpush2.msra.mxu0 0.0
    %669 = vmatprep.subr.mxu0 0.0
    %670 = vmatpush2.msra.mxu0 0.0
    %671 = vmatprep.subr.mxu0 0.0
    %672 = vmatpush2.msra.mxu0 0.0
    %673 = vmatprep.mubr.f32.mxu0 0.0
    %v674 = vand.u32 %v601, 4294901760
    %v675 = vsub.f32 %v601, %v674
    %v676 = vand.u32 %v675, 4294901760
    %v677 = vsub.f32 %v675, %v676
    %v678 = vand.u32 %v677, 4294901760
    %679 = vmatmul.mubr.f32.gmra.mxu0 %v678
    %v680 = vpop.f32.mrf.mxu0
    %v681 = vadd.f32 %v597, %v680
    %v682 = vpop.f32.mrf.mxu0
    %683 = vdwg.mxu0
    %684 = vmatprep.subr.mxu0 0.0
    %685 = vmatpush1.msra.mxu0 0.0
    %686 = vmatprep.subr.mxu0 0.0
    %687 = vmatpush1.msra.mxu0 0.0
    %688 = vmatprep.subr.mxu0 0.0
    %689 = vmatpush1.msra.mxu0 0.0
    %690 = vmatprep.subr.mxu0 0.0
    %691 = vmatpush1.msra.mxu0 0.0
    %692 = vmatprep.subr.mxu0 0.0
    %693 = vmatpush1.msra.mxu0 0.0
    %694 = vmatprep.subr.mxu0 0.0
    %695 = vmatpush1.msra.mxu0 0.0
    %696 = vmatprep.subr.mxu0 0.0
    %697 = vmatpush1.msra.mxu0 0.0
    %698 = vmatprep.subr.mxu0 0.0
    %699 = vmatpush1.msra.mxu0 0.0
    %700 = vmatprep.subr.mxu0 0.0
    %701 = vmatpush1.msra.mxu0 0.0
    %702 = vmatprep.subr.mxu0 0.0
    %703 = vmatpush1.msra.mxu0 0.0
    %704 = vmatprep.subr.mxu0 0.0
    %705 = vmatpush1.msra.mxu0 0.0
    %706 = vmatprep.subr.mxu0 0.0
    %707 = vmatpush1.msra.mxu0 0.0
    %708 = vmatprep.subr.mxu0 0.0
    %709 = vmatpush1.msra.mxu0 0.0
    %710 = vmatprep.subr.mxu0 0.0
    %v711 = vand.u32 %v604, 4294901760
    %v712 = vsub.f32 %v604, %v711
    %v713 = vand.u32 %v712, 4294901760
    %v714 = vsub.f32 %v712, %v713
    %v715 = vand.u32 %v714, 4294901760
    %716 = vmatpush1.msra.mxu0 %v715
    %717 = vmatprep.subr.mxu0 0.0
    %v718 = vand.u32 %v590, 4294901760
    %v719 = vsub.f32 %v590, %v718
    %v720 = vand.u32 %v719, 4294901760
    %v721 = vsub.f32 %v719, %v720
    %v722 = vand.u32 %v721, 4294901760
    %723 = vmatpush1.msra.mxu0 %v722
    %724 = vmatprep.subr.mxu0 0.0
    %v725 = vand.u32 %v589, 4294901760
    %v726 = vsub.f32 %v589, %v725
    %v727 = vand.u32 %v726, 4294901760
    %v728 = vsub.f32 %v726, %v727
    %v729 = vand.u32 %v728, 4294901760
    %730 = vmatpush1.msra.mxu0 %v729
    %731 = vmatprep.subr.mxu0 0.0
    %732 = vmatpush2.msra.mxu0 0.0
    %733 = vmatprep.subr.mxu0 0.0
    %734 = vmatpush2.msra.mxu0 0.0
    %735 = vmatprep.subr.mxu0 0.0
    %736 = vmatpush2.msra.mxu0 0.0
    %737 = vmatprep.subr.mxu0 0.0
    %738 = vmatpush2.msra.mxu0 0.0
    %739 = vmatprep.subr.mxu0 0.0
    %740 = vmatpush2.msra.mxu0 0.0
    %741 = vmatprep.subr.mxu0 0.0
    %742 = vmatpush2.msra.mxu0 0.0
    %743 = vmatprep.subr.mxu0 0.0
    %744 = vmatpush2.msra.mxu0 0.0
    %745 = vmatprep.subr.mxu0 0.0
    %746 = vmatpush2.msra.mxu0 0.0
    %747 = vmatprep.subr.mxu0 0.0
    %748 = vmatpush2.msra.mxu0 0.0
    %749 = vmatprep.subr.mxu0 0.0
    %750 = vmatpush2.msra.mxu0 0.0
    %751 = vmatprep.subr.mxu0 0.0
    %752 = vmatpush2.msra.mxu0 0.0
    %753 = vmatprep.subr.mxu0 0.0
    %754 = vmatpush2.msra.mxu0 0.0
    %755 = vmatprep.subr.mxu0 0.0
    %756 = vmatpush2.msra.mxu0 0.0
    %757 = vmatprep.subr.mxu0 0.0
    %758 = vmatpush2.msra.mxu0 0.0
    %759 = vmatprep.subr.mxu0 0.0
    %760 = vmatpush2.msra.mxu0 0.0
    %761 = vmatprep.subr.mxu0 0.0
    %762 = vmatpush2.msra.mxu0 0.0
    %763 = vmatprep.mubr.f32.mxu0 0.0
    %v764 = vand.u32 %v601, 4294901760
    %765 = vmatmul.mubr.f32.gmra.mxu0 %v764
    %v766 = vpop.f32.mrf.mxu0
    %v767 = vadd.f32 %v681, %v766
    %v768 = vpop.f32.mrf.mxu0
    %769 = vdwg.mxu0
    %770 = vmatprep.subr.mxu0 0.0
    %771 = vmatpush1.msra.mxu0 0.0
    %772 = vmatprep.subr.mxu0 0.0
    %773 = vmatpush1.msra.mxu0 0.0
    %774 = vmatprep.subr.mxu0 0.0
    %775 = vmatpush1.msra.mxu0 0.0
    %776 = vmatprep.subr.mxu0 0.0
    %777 = vmatpush1.msra.mxu0 0.0
    %778 = vmatprep.subr.mxu0 0.0
    %779 = vmatpush1.msra.mxu0 0.0
    %780 = vmatprep.subr.mxu0 0.0
    %781 = vmatpush1.msra.mxu0 0.0
    %782 = vmatprep.subr.mxu0 0.0
    %783 = vmatpush1.msra.mxu0 0.0
    %784 = vmatprep.subr.mxu0 0.0
    %785 = vmatpush1.msra.mxu0 0.0
    %786 = vmatprep.subr.mxu0 0.0
    %787 = vmatpush1.msra.mxu0 0.0
    %788 = vmatprep.subr.mxu0 0.0
    %789 = vmatpush1.msra.mxu0 0.0
    %790 = vmatprep.subr.mxu0 0.0
    %791 = vmatpush1.msra.mxu0 0.0
    %792 = vmatprep.subr.mxu0 0.0
    %793 = vmatpush1.msra.mxu0 0.0
    %794 = vmatprep.subr.mxu0 0.0
    %795 = vmatpush1.msra.mxu0 0.0
    %796 = vmatprep.subr.mxu0 0.0
    %v797 = vand.u32 %v604, 4294901760
    %v798 = vsub.f32 %v604, %v797
    %799 = vmatpush1.msra.mxu0 %v798
    %800 = vmatprep.subr.mxu0 0.0
    %v801 = vand.u32 %v590, 4294901760
    %v802 = vsub.f32 %v590, %v801
    %803 = vmatpush1.msra.mxu0 %v802
    %804 = vmatprep.subr.mxu0 0.0
    %v805 = vand.u32 %v589, 4294901760
    %v806 = vsub.f32 %v589, %v805
    %807 = vmatpush1.msra.mxu0 %v806
    %808 = vmatprep.subr.mxu0 0.0
    %809 = vmatpush2.msra.mxu0 0.0
    %810 = vmatprep.subr.mxu0 0.0
    %811 = vmatpush2.msra.mxu0 0.0
    %812 = vmatprep.subr.mxu0 0.0
    %813 = vmatpush2.msra.mxu0 0.0
    %814 = vmatprep.subr.mxu0 0.0
    %815 = vmatpush2.msra.mxu0 0.0
    %816 = vmatprep.subr.mxu0 0.0
    %817 = vmatpush2.msra.mxu0 0.0
    %818 = vmatprep.subr.mxu0 0.0
    %819 = vmatpush2.msra.mxu0 0.0
    %820 = vmatprep.subr.mxu0 0.0
    %821 = vmatpush2.msra.mxu0 0.0
    %822 = vmatprep.subr.mxu0 0.0
    %823 = vmatpush2.msra.mxu0 0.0
    %824 = vmatprep.subr.mxu0 0.0
    %825 = vmatpush2.msra.mxu0 0.0
    %826 = vmatprep.subr.mxu0 0.0
    %827 = vmatpush2.msra.mxu0 0.0
    %828 = vmatprep.subr.mxu0 0.0
    %829 = vmatpush2.msra.mxu0 0.0
    %830 = vmatprep.subr.mxu0 0.0
    %831 = vmatpush2.msra.mxu0 0.0
    %832 = vmatprep.subr.mxu0 0.0
    %833 = vmatpush2.msra.mxu0 0.0
    %834 = vmatprep.subr.mxu0 0.0
    %835 = vmatpush2.msra.mxu0 0.0
    %836 = vmatprep.subr.mxu0 0.0
    %837 = vmatpush2.msra.mxu0 0.0
    %838 = vmatprep.subr.mxu0 0.0
    %839 = vmatpush2.msra.mxu0 0.0
    %840 = vmatprep.mubr.f32.mxu0 0.0
    %v841 = vand.u32 %v601, 4294901760
    %v842 = vsub.f32 %v601, %v841
    %843 = vmatmul.mubr.f32.gmra.mxu0 %v842
    %v844 = vpop.f32.mrf.mxu0
    %v845 = vadd.f32 %v767, %v844
    %v846 = vpop.f32.mrf.mxu0
    %847 = vdwg.mxu0
    %848 = vmatprep.subr.mxu0 0.0
    %849 = vmatpush1.msra.mxu0 0.0
    %850 = vmatprep.subr.mxu0 0.0
    %851 = vmatpush1.msra.mxu0 0.0
    %852 = vmatprep.subr.mxu0 0.0
    %853 = vmatpush1.msra.mxu0 0.0
    %854 = vmatprep.subr.mxu0 0.0
    %855 = vmatpush1.msra.mxu0 0.0
    %856 = vmatprep.subr.mxu0 0.0
    %857 = vmatpush1.msra.mxu0 0.0
    %858 = vmatprep.subr.mxu0 0.0
    %859 = vmatpush1.msra.mxu0 0.0
    %860 = vmatprep.subr.mxu0 0.0
    %861 = vmatpush1.msra.mxu0 0.0
    %862 = vmatprep.subr.mxu0 0.0
    %863 = vmatpush1.msra.mxu0 0.0
    %864 = vmatprep.subr.mxu0 0.0
    %865 = vmatpush1.msra.mxu0 0.0
    %866 = vmatprep.subr.mxu0 0.0
    %867 = vmatpush1.msra.mxu0 0.0
    %868 = vmatprep.subr.mxu0 0.0
    %869 = vmatpush1.msra.mxu0 0.0
    %870 = vmatprep.subr.mxu0 0.0
    %871 = vmatpush1.msra.mxu0 0.0
    %872 = vmatprep.subr.mxu0 0.0
    %873 = vmatpush1.msra.mxu0 0.0
    %874 = vmatprep.subr.mxu0 0.0
    %v875 = vand.u32 %v604, 4294901760
    %876 = vmatpush1.msra.mxu0 %v875
    %877 = vmatprep.subr.mxu0 0.0
    %v878 = vand.u32 %v590, 4294901760
    %879 = vmatpush1.msra.mxu0 %v878
    %880 = vmatprep.subr.mxu0 0.0
    %v881 = vand.u32 %v589, 4294901760
    %882 = vmatpush1.msra.mxu0 %v881
    %883 = vmatprep.subr.mxu0 0.0
    %884 = vmatpush2.msra.mxu0 0.0
    %885 = vmatprep.subr.mxu0 0.0
    %886 = vmatpush2.msra.mxu0 0.0
    %887 = vmatprep.subr.mxu0 0.0
    %888 = vmatpush2.msra.mxu0 0.0
    %889 = vmatprep.subr.mxu0 0.0
    %890 = vmatpush2.msra.mxu0 0.0
    %891 = vmatprep.subr.mxu0 0.0
    %892 = vmatpush2.msra.mxu0 0.0
    %893 = vmatprep.subr.mxu0 0.0
    %894 = vmatpush2.msra.mxu0 0.0
    %895 = vmatprep.subr.mxu0 0.0
    %896 = vmatpush2.msra.mxu0 0.0
    %897 = vmatprep.subr.mxu0 0.0
    %898 = vmatpush2.msra.mxu0 0.0
    %899 = vmatprep.subr.mxu0 0.0
    %900 = vmatpush2.msra.mxu0 0.0
    %901 = vmatprep.subr.mxu0 0.0
    %902 = vmatpush2.msra.mxu0 0.0
    %903 = vmatprep.subr.mxu0 0.0
    %904 = vmatpush2.msra.mxu0 0.0
    %905 = vmatprep.subr.mxu0 0.0
    %906 = vmatpush2.msra.mxu0 0.0
    %907 = vmatprep.subr.mxu0 0.0
    %908 = vmatpush2.msra.mxu0 0.0
    %909 = vmatprep.subr.mxu0 0.0
    %910 = vmatpush2.msra.mxu0 0.0
    %911 = vmatprep.subr.mxu0 0.0
    %912 = vmatpush2.msra.mxu0 0.0
    %913 = vmatprep.subr.mxu0 0.0
    %914 = vmatpush2.msra.mxu0 0.0
    %915 = vmatprep.mubr.f32.mxu0 0.0
    %v916 = vand.u32 %v601, 4294901760
    %v917 = vsub.f32 %v601, %v916
    %v918 = vand.u32 %v917, 4294901760
    %919 = vmatmul.mubr.f32.gmra.mxu0 %v918
    %v920 = vpop.f32.mrf.mxu0
    %v921 = vadd.f32 %v845, %v920
    %v922 = vpop.f32.mrf.mxu0
    %923 = vdwg.mxu0
    %924 = vmatprep.subr.mxu0 0.0
    %925 = vmatpush1.msra.mxu0 0.0
    %926 = vmatprep.subr.mxu0 0.0
    %927 = vmatpush1.msra.mxu0 0.0
    %928 = vmatprep.subr.mxu0 0.0
    %929 = vmatpush1.msra.mxu0 0.0
    %930 = vmatprep.subr.mxu0 0.0
    %931 = vmatpush1.msra.mxu0 0.0
    %932 = vmatprep.subr.mxu0 0.0
    %933 = vmatpush1.msra.mxu0 0.0
    %934 = vmatprep.subr.mxu0 0.0
    %935 = vmatpush1.msra.mxu0 0.0
    %936 = vmatprep.subr.mxu0 0.0
    %937 = vmatpush1.msra.mxu0 0.0
    %938 = vmatprep.subr.mxu0 0.0
    %939 = vmatpush1.msra.mxu0 0.0
    %940 = vmatprep.subr.mxu0 0.0
    %941 = vmatpush1.msra.mxu0 0.0
    %942 = vmatprep.subr.mxu0 0.0
    %943 = vmatpush1.msra.mxu0 0.0
    %944 = vmatprep.subr.mxu0 0.0
    %945 = vmatpush1.msra.mxu0 0.0
    %946 = vmatprep.subr.mxu0 0.0
    %947 = vmatpush1.msra.mxu0 0.0
    %948 = vmatprep.subr.mxu0 0.0
    %949 = vmatpush1.msra.mxu0 0.0
    %950 = vmatprep.subr.mxu0 0.0
    %v951 = vand.u32 %v604, 4294901760
    %v952 = vsub.f32 %v604, %v951
    %v953 = vand.u32 %v952, 4294901760
    %954 = vmatpush1.msra.mxu0 %v953
    %955 = vmatprep.subr.mxu0 0.0
    %v956 = vand.u32 %v590, 4294901760
    %v957 = vsub.f32 %v590, %v956
    %v958 = vand.u32 %v957, 4294901760
    %959 = vmatpush1.msra.mxu0 %v958
    %960 = vmatprep.subr.mxu0 0.0
    %v961 = vand.u32 %v589, 4294901760
    %v962 = vsub.f32 %v589, %v961
    %v963 = vand.u32 %v962, 4294901760
    %964 = vmatpush1.msra.mxu0 %v963
    %965 = vmatprep.subr.mxu0 0.0
    %966 = vmatpush2.msra.mxu0 0.0
    %967 = vmatprep.subr.mxu0 0.0
    %968 = vmatpush2.msra.mxu0 0.0
    %969 = vmatprep.subr.mxu0 0.0
    %970 = vmatpush2.msra.mxu0 0.0
    %971 = vmatprep.subr.mxu0 0.0
    %972 = vmatpush2.msra.mxu0 0.0
    %973 = vmatprep.subr.mxu0 0.0
    %974 = vmatpush2.msra.mxu0 0.0
    %975 = vmatprep.subr.mxu0 0.0
    %976 = vmatpush2.msra.mxu0 0.0
    %977 = vmatprep.subr.mxu0 0.0
    %978 = vmatpush2.msra.mxu0 0.0
    %979 = vmatprep.subr.mxu0 0.0
    %980 = vmatpush2.msra.mxu0 0.0
    %981 = vmatprep.subr.mxu0 0.0
    %982 = vmatpush2.msra.mxu0 0.0
    %983 = vmatprep.subr.mxu0 0.0
    %984 = vmatpush2.msra.mxu0 0.0
    %985 = vmatprep.subr.mxu0 0.0
    %986 = vmatpush2.msra.mxu0 0.0
    %987 = vmatprep.subr.mxu0 0.0
    %988 = vmatpush2.msra.mxu0 0.0
    %989 = vmatprep.subr.mxu0 0.0
    %990 = vmatpush2.msra.mxu0 0.0
    %991 = vmatprep.subr.mxu0 0.0
    %992 = vmatpush2.msra.mxu0 0.0
    %993 = vmatprep.subr.mxu0 0.0
    %994 = vmatpush2.msra.mxu0 0.0
    %995 = vmatprep.subr.mxu0 0.0
    %996 = vmatpush2.msra.mxu0 0.0
    %997 = vmatprep.mubr.f32.mxu0 0.0
    %v998 = vand.u32 %v601, 4294901760
    %999 = vmatmul.mubr.f32.gmra.mxu0 %v998
    %v1000 = vpop.f32.mrf.mxu0
    %v1001 = vadd.f32 %v921, %v1000
    %v1002 = vpop.f32.mrf.mxu0
    %1003 = vdwg.mxu0
    %1004 = vmatprep.subr.mxu0 0.0
    %1005 = vmatpush1.msra.mxu0 0.0
    %1006 = vmatprep.subr.mxu0 0.0
    %1007 = vmatpush1.msra.mxu0 0.0
    %1008 = vmatprep.subr.mxu0 0.0
    %1009 = vmatpush1.msra.mxu0 0.0
    %1010 = vmatprep.subr.mxu0 0.0
    %1011 = vmatpush1.msra.mxu0 0.0
    %1012 = vmatprep.subr.mxu0 0.0
    %1013 = vmatpush1.msra.mxu0 0.0
    %1014 = vmatprep.subr.mxu0 0.0
    %1015 = vmatpush1.msra.mxu0 0.0
    %1016 = vmatprep.subr.mxu0 0.0
    %1017 = vmatpush1.msra.mxu0 0.0
    %1018 = vmatprep.subr.mxu0 0.0
    %1019 = vmatpush1.msra.mxu0 0.0
    %1020 = vmatprep.subr.mxu0 0.0
    %1021 = vmatpush1.msra.mxu0 0.0
    %1022 = vmatprep.subr.mxu0 0.0
    %1023 = vmatpush1.msra.mxu0 0.0
    %1024 = vmatprep.subr.mxu0 0.0
    %1025 = vmatpush1.msra.mxu0 0.0
    %1026 = vmatprep.subr.mxu0 0.0
    %1027 = vmatpush1.msra.mxu0 0.0
    %1028 = vmatprep.subr.mxu0 0.0
    %1029 = vmatpush1.msra.mxu0 0.0
    %1030 = vmatprep.subr.mxu0 0.0
    %v1031 = vand.u32 %v604, 4294901760
    %1032 = vmatpush1.msra.mxu0 %v1031
    %1033 = vmatprep.subr.mxu0 0.0
    %v1034 = vand.u32 %v590, 4294901760
    %1035 = vmatpush1.msra.mxu0 %v1034
    %1036 = vmatprep.subr.mxu0 0.0
    %v1037 = vand.u32 %v589, 4294901760
    %1038 = vmatpush1.msra.mxu0 %v1037
    %1039 = vmatprep.subr.mxu0 0.0
    %1040 = vmatpush2.msra.mxu0 0.0
    %1041 = vmatprep.subr.mxu0 0.0
    %1042 = vmatpush2.msra.mxu0 0.0
    %1043 = vmatprep.subr.mxu0 0.0
    %1044 = vmatpush2.msra.mxu0 0.0
    %1045 = vmatprep.subr.mxu0 0.0
    %1046 = vmatpush2.msra.mxu0 0.0
    %1047 = vmatprep.subr.mxu0 0.0
    %1048 = vmatpush2.msra.mxu0 0.0
    %1049 = vmatprep.subr.mxu0 0.0
    %1050 = vmatpush2.msra.mxu0 0.0
    %1051 = vmatprep.subr.mxu0 0.0
    %1052 = vmatpush2.msra.mxu0 0.0
    %1053 = vmatprep.subr.mxu0 0.0
    %1054 = vmatpush2.msra.mxu0 0.0
    %1055 = vmatprep.subr.mxu0 0.0
    %1056 = vmatpush2.msra.mxu0 0.0
    %1057 = vmatprep.subr.mxu0 0.0
    %1058 = vmatpush2.msra.mxu0 0.0
    %1059 = vmatprep.subr.mxu0 0.0
    %1060 = vmatpush2.msra.mxu0 0.0
    %1061 = vmatprep.subr.mxu0 0.0
    %1062 = vmatpush2.msra.mxu0 0.0
    %1063 = vmatprep.subr.mxu0 0.0
    %1064 = vmatpush2.msra.mxu0 0.0
    %1065 = vmatprep.subr.mxu0 0.0
    %1066 = vmatpush2.msra.mxu0 0.0
    %1067 = vmatprep.subr.mxu0 0.0
    %1068 = vmatpush2.msra.mxu0 0.0
    %1069 = vmatprep.subr.mxu0 0.0
    %1070 = vmatpush2.msra.mxu0 0.0
    %1071 = vmatprep.mubr.f32.mxu0 0.0
    %v1072 = vand.u32 %v601, 4294901760
    %1073 = vmatmul.mubr.f32.gmra.mxu0 %v1072
    %v1074 = vpop.f32.mrf.mxu0
    %v1075 = vadd.f32 %v1001, %v1074
    %v1076 = vpop.f32.mrf.mxu0
    %1077 = vdwg.mxu0
    %1078 = vst [vmem:[#allocation2] sm:$0x7] %v1075
    // Predicated region
    $region22: #{tpu_custom_call.1} parent=1 // pred_check
      _
    $region23: #{tpu_custom_call.1} parent=1 // pred_check_branch
      %1080 = sbr.rel (0) target = $region25
    $region24: #{tpu_custom_call.1} parent=1 // pred_region
      %s1082 = ssub.s32 64, 64
      %1083 = vsyncadd [#allocation3], %s1082
      %s1085 = sshll.u32 [#allocation2], 4
      %s1086 = int_to_ptr.vmem [resolvable:$true] %s1085
      %1088 = dma.vmem_to_hbm [thread:$0]  %s1086, 64, %s5, [#allocation3]
    $region25: #{tpu_custom_call.1} parent=1 // pred_fallthru
      _
    // Predicated region
    $region26: #{tpu_custom_call.1} parent=1 // pred_check
      _
    $region27: #{tpu_custom_call.1} parent=1 // pred_check_branch
      %1090 = sbr.rel (0) target = $region29
    $region28: #{tpu_custom_call.1} parent=1 // pred_region
      %1091 = dma.done [#allocation3], 64
    $region29: #{tpu_custom_call.1} parent=1 // pred_fallthru
      _
    %1092 = vsyncpa [#allocation3], 1

</llo_original>
